<compile_context>
chip_gen: v5e
topology: v5e:2x2
jax: 0.10.0
libtpu: 0.0.40
codegen_flags: <defaults>
</compile_context>

<pallas_src>
import numpy as np

import jax
import jax.numpy as jnp
from jax.experimental import pallas as pl
from jax.experimental.pallas import tpu as pltpu

BIG_PRIME = 17461204521323        # matches big_prime_number in the reference
MASK64 = (1 << 64) - 1


# ----------------------------------------------------------------------------
# Pallas kernel: closed-form nearest / second-nearest centroid for an evenly
# spaced centroid grid.  Emits packed code = idx1 * P + idx2.
# ----------------------------------------------------------------------------
def _make_grid_top2_kernel(lo, delta, n_partitions, out_dtype):
    lo_f = float(lo)
    inv_d = float(1.0 / float(delta))
    P = int(n_partitions)
    pm1 = float(P - 1)

    def kernel(x_ref, out_ref):
        x = x_ref[...]                                  # (TR, L) float32
        t = (x - lo_f) * inv_d                          # position in bin units
        # Nearest centroid: round-half-DOWN (midpoint ties -> lower index,
        # same as the reference strict-< scan), clipped to the grid.  Clip in
        # float BEFORE the int cast so huge / out-of-range x stay well-defined.
        i1f = jnp.clip(jnp.ceil(t - 0.5), 0.0, pm1)
        r = t - i1f                                     # signed residual (bins)
        i1 = i1f.astype(jnp.int32)
        # Second nearest = neighbor on the residual's side; r == 0 (exactly on
        # a centroid) goes DOWN, matching the reference scan; clamp both edges.
        i2 = jnp.where(r > 0.0, i1 + 1, i1 - 1)
        i2 = jnp.where(i2 < 0, 1, i2)
        i2 = jnp.where(i2 > P - 1, P - 2, i2)
        out_ref[...] = (i1 * P + i2).astype(out_dtype)

    return kernel


def _round_up(a, b):
    return (a + b - 1) // b * b


def _lane_shape(n):
    """Pick a lane-dense (rows, cols) view of n flat elements, cols % 128 == 0.

    Prefer wide (512-2048) lanes when there are plenty of rows; otherwise fall
    back to 128 lanes so the sublane dimension stays as full as possible.
    Returns (rows, cols, n_padded); n_padded > n only when 128 does not divide n.
    """
    for L in (2048, 1024, 512, 256, 128):
        if n % L == 0 and n // L >= 64:
            return n // L, L, n
    if n % 128 == 0:
        return n // 128, 128, n
    npad = _round_up(n, 128)
    return npad // 128, 128, npad


def _pick_row_tile(rows, cols, budget_bytes=8 << 20):
    """Row tile per grid step.

    Per-step footprint ~= 2*(4B in + 1B out) * tr * cols (double buffered);
    target multi-MiB blocks (per-step overhead ~0.35 us) while staying well
    inside v7x's smaller scoped VMEM.  Also guarantee >= 2 grid steps when
    possible so the "parallel" row axis actually splits across v7x's two TCs.
    """
    if rows <= 32:
        return rows                                   # single full block
    tr = max(32, (budget_bytes // (10 * cols)) // 32 * 32)
    tr = min(tr, _round_up(rows, 32))
    if tr >= rows:                                    # force >= 2 grid steps
        tr = max(32, _round_up((rows + 1) // 2, 32))
    return tr


def partition_codes_flat(flat, lo, delta, n_partitions):
    """flat: (N,) float -> (N,) packed codes (idx1 * P + idx2), int8 (or int32
    for tiny inputs)."""
    P = int(n_partitions)
    assert P >= 2
    assert P * P - 1 <= 127, "packed code must fit in int8"
    n = flat.shape[0]
    rows, cols, npad = _lane_shape(n)
    x = flat.astype(jnp.float32)
    if npad != n:
        # Tail pad only (< 128 elements of padding) -- hit only when the total
        # element count is not a multiple of 128.
        x = jnp.pad(x, (0, npad - n))
    x2d = x.reshape(rows, cols)
    tr = _pick_row_tile(rows, cols)
    # int8 packed codes (4x less writeback / device->host); tiny inputs fall
    # back to int32 for a clean native layout (perf-irrelevant at that size).
    out_dtype = jnp.int8 if rows >= 32 else jnp.int32

    kernel = _make_grid_top2_kernel(lo, delta, P, out_dtype)
    codes = pl.pallas_call(
        kernel,
        out_shape=jax.ShapeDtypeStruct((rows, cols), out_dtype),
        grid=(pl.cdiv(rows, tr),),
        in_specs=[pl.BlockSpec((tr, cols), lambda i: (i, 0))],
        out_specs=pl.BlockSpec((tr, cols), lambda i: (i, 0)),
        compiler_params=pltpu.CompilerParams(
            dimension_semantics=("parallel",),
            vmem_limit_bytes=32 << 20),
    )(x2d)
    return codes.reshape(-1)[:n]


# ----------------------------------------------------------------------------
# Exact rolling hash from hash_tensor():  h = (h + t + 1) * BIG_PRIME,
# applied over the flattened fuzz tensor.  Closed form (mod 2^64):
#   h = sum_i (t_i + 1) * BIG_PRIME^(n - i)
# evaluated host-side as a vectorized uint64 multiply-accumulate (numpy
# integer arrays wrap mod 2^64, identical to torch int64 wraparound).
# ----------------------------------------------------------------------------
def _hash_powers(n):
    pw = []
    acc = 1
    for _ in range(n):
        acc = (acc * BIG_PRIME) & MASK64
        pw.append(acc)
    pw.reverse()                      # [p^n, p^(n-1), ..., p^1]
    return np.array(pw, dtype=np.uint64)


def _window_hashes(flat_u64, pw):
    # flat_u64: (B, n) uint64, pw: (n,) uint64 -> (B,) int64 (signed view)
    terms = (flat_u64 + np.uint64(1)) * pw[None, :]       # wraps mod 2^64
    return terms.sum(axis=1).view(np.int64)


# ----------------------------------------------------------------------------
# Synthetic fuzzy grid partitioner (the `partitioner` module passed to
# Tokenizer.__init__): deterministic, evenly spaced centroids.
# ----------------------------------------------------------------------------
class GridPartitioner:
    def __init__(self, n_partitions=8, lo=-2.0, hi=2.0):
        self.n_partitions = int(n_partitions)
        self.lo = float(lo)
        self.hi = float(hi)
        self.delta = (self.hi - self.lo) / (self.n_partitions - 1)
        self.centroids = np.linspace(lo, hi, n_partitions, dtype=np.float32)
        # Closed-form kernel requires a uniform grid (true by construction).
        assert np.allclose(np.diff(self.centroids.astype(np.float64)),
                           self.delta, rtol=1e-5, atol=1e-6)

    def packed_codes(self, data):
        # data: (B, C, S) -> (B, C, S) packed codes (device array)
        shape = data.shape
        flat = jnp.asarray(data, jnp.float32).reshape(-1)
        codes = partition_codes_flat(flat, self.lo, self.delta,
                                     self.n_partitions)
        return codes.reshape(shape)

    def __call__(self, data, mode="indexes", k=2):
        # Reference-style interface: (B, C, W) -> fuzz indexes (B, C, W, 2)
        assert mode == "indexes" and k == 2
        codes = np.asarray(jax.device_get(self.packed_codes(data)))
        P = self.n_partitions
        return np.stack([codes // P, codes % P], axis=-1)


# ----------------------------------------------------------------------------
# Tokenizer (forward semantics of the PyTorch module)
# ----------------------------------------------------------------------------
class Tokenizer:
    def __init__(self, partitioner, embed_dim, window_size, step_size):
        self.partitioner = partitioner
        self.window_size = window_size
        self.step_size = step_size
        self.embed_dim = embed_dim
        self.vocab = {}               # python dict state, same as reference
        self.vocab_size = 1
        self.training = True

    def total_tokens(self, samples):
        inc = 0 if (samples - self.window_size) % self.step_size == 0 else 1
        return (samples - self.window_size) // self.step_size + inc

    def sliding_window(self, samples):
        return list(range(0, samples - self.window_size, self.step_size))

    def freeze(self):
        self.training = False

    def __call__(self, x):
        batch, channels, samples = x.shape
        if samples < self.window_size:
            raise Exception("There are less samples than the window_size")
        num_tokens = self.total_tokens(samples)
        windows = self.sliding_window(samples)

        # One Pallas pass over all samples (the per-sample partition index is
        # window-independent) + ONE device->host transfer of packed codes.
        codes = np.asarray(jax.device_get(self.partitioner.packed_codes(x)))
        P = self.partitioner.n_partitions
        fuzz = np.stack([codes // P, codes % P], axis=-1).astype(np.uint64)

        W = self.window_size
        n = channels * W * 2
        pw = _hash_powers(n)

        tokens = np.zeros((batch, num_tokens), dtype=np.int64)
        for ix, window in enumerate(windows):
            flat = fuzz[:, :, window:window + W, :].reshape(batch, -1)
            hashes = _window_hashes(flat, pw)             # (B,) int64
            for b in range(batch):
                token = int(hashes[b])
                if self.training:
                    if token in self.vocab:
                        num_token = self.vocab[token]
                    else:
                        self.vocab[token] = self.vocab_size
                        num_token = self.vocab_size
                        self.vocab_size += 1
                else:
                    num_token = self.vocab.get(token, 0)
                tokens[b, ix] = num_token
        # TODO(synk): python dict vocab lookup has no Pallas equivalent; kept host-side.
        # Vocab ids are small; returned as int32 device array (x64 disabled).
        return jnp.asarray(tokens.astype(np.int32))


if __name__ == "__main__":
    B, C, S = 2, 4, 16
    window_size, step_size, embed_dim = 8, 4, 32

    key = jax.random.PRNGKey(0)
    x = jax.random.normal(key, (B, C, S), dtype=jnp.float32)   # (B, C, samples)

    partitioner = GridPartitioner(n_partitions=8)
    tok = Tokenizer(partitioner, embed_dim=embed_dim,
                    window_size=window_size, step_size=step_size)

    tokens = tok(x)
    jax.block_until_ready(tokens)
    assert tokens.shape == (B, tok.total_tokens(S))

    P = partitioner.n_partitions

    # Self-check 1: closed-form kernel vs brute-force top-2 (numpy, f32),
    # skipping elements within float rounding distance of a tie boundary.
    codes3 = np.asarray(jax.device_get(partitioner.packed_codes(x))).astype(np.int64)
    xf = np.asarray(jax.device_get(x)).astype(np.float32).reshape(-1)
    cents = partitioner.centroids.astype(np.float32)
    d = np.abs(xf[:, None] - cents[None, :])
    i1 = np.argmin(d, axis=1)                      # first min == lowest index
    d2 = d.copy()
    d2[np.arange(d2.shape[0]), i1] = np.inf
    i2 = np.argmin(d2, axis=1)
    ref_codes = (i1 * P + i2).astype(np.int64)
    t = (xf.astype(np.float64) - partitioner.lo) / partitioner.delta
    safe = (np.abs(t - np.floor(t) - 0.5) > 1e-4) & (np.abs(t - np.round(t)) > 1e-4)
    assert np.array_equal(codes3.reshape(-1)[safe], ref_codes[safe])

    # Self-check 2: vectorized polynomial hash == sequential reference recurrence.
    fz = np.stack([codes3 // P, codes3 % P], axis=-1)
    seq = fz[0, :, 0:window_size, :].reshape(-1)
    h_seq = 0
    for v in seq.tolist():
        h_seq = ((h_seq + int(v) + 1) * BIG_PRIME) & MASK64
    h_vec = int(_window_hashes(seq.reshape(1, -1).astype(np.uint64),
                               _hash_powers(seq.size))[0]) & MASK64
    assert h_seq == h_vec

    print("KERNEL_OK")
</pallas_src>

<mosaic_0001>
module attributes {stable_mosaic.version = 11 : i64} {
  func.func @kernel(%arg0: i32, %arg1: memref<1x128xf32, #tpu.memory_space<vmem>>, %arg2: memref<1x128xi32, #tpu.memory_space<vmem>>) attributes {dimension_semantics = [#tpu.dimension_semantics<parallel>], iteration_bounds = array<i64: 1>, scalar_prefetch = 0 : i64, scratch_operands = 0 : i64, tpu.core_type = #tpu.core_type<tc>, window_params = [{transform_indices = @transform_0, window_bounds = array<i64: 1, 128>}, {transform_indices = @transform_1, window_bounds = array<i64: 1, 128>}]} {
    %c0 = arith.constant 0 : index
    %c0_0 = arith.constant 0 : index
    %0 = vector.load %arg1[%c0, %c0_0] : memref<1x128xf32, #tpu.memory_space<vmem>>, vector<1x128xf32>
    %cst = arith.constant -2.000000e+00 : f32
    %1 = vector.broadcast %cst : f32 to vector<1x128xf32>
    %2 = arith.subf %0, %1 : vector<1x128xf32>
    %cst_1 = arith.constant 1.750000e+00 : f32
    %3 = vector.broadcast %cst_1 : f32 to vector<1x128xf32>
    %4 = arith.mulf %2, %3 : vector<1x128xf32>
    %cst_2 = arith.constant 5.000000e-01 : f32
    %5 = vector.broadcast %cst_2 : f32 to vector<1x128xf32>
    %6 = arith.subf %4, %5 : vector<1x128xf32>
    %7 = math.ceil %6 : vector<1x128xf32>
    %cst_3 = arith.constant 0.000000e+00 : f32
    %cst_4 = arith.constant 7.000000e+00 : f32
    %8 = vector.broadcast %cst_3 : f32 to vector<1x128xf32>
    %9 = arith.maximumf %8, %7 : vector<1x128xf32>
    %10 = vector.broadcast %cst_4 : f32 to vector<1x128xf32>
    %11 = arith.minimumf %10, %9 : vector<1x128xf32>
    %12 = arith.subf %4, %11 : vector<1x128xf32>
    %13 = arith.fptosi %11 : vector<1x128xf32> to vector<1x128xi32>
    %cst_5 = arith.constant 0.000000e+00 : f32
    %14 = vector.broadcast %cst_5 : f32 to vector<1x128xf32>
    %15 = arith.cmpf ogt, %12, %14 : vector<1x128xf32>
    %c1_i32 = arith.constant 1 : i32
    %16 = vector.broadcast %c1_i32 : i32 to vector<1x128xi32>
    %17 = arith.addi %13, %16 : vector<1x128xi32>
    %c1_i32_6 = arith.constant 1 : i32
    %18 = vector.broadcast %c1_i32_6 : i32 to vector<1x128xi32>
    %19 = arith.subi %13, %18 : vector<1x128xi32>
    %20 = arith.select %15, %17, %19 : vector<1x128xi1>, vector<1x128xi32>
    %c0_i32 = arith.constant 0 : i32
    %21 = vector.broadcast %c0_i32 : i32 to vector<1x128xi32>
    %22 = arith.cmpi slt, %20, %21 : vector<1x128xi32>
    %c1_i32_7 = arith.constant 1 : i32
    %23 = vector.broadcast %c1_i32_7 : i32 to vector<1x128xi32>
    %24 = arith.select %22, %23, %20 : vector<1x128xi1>, vector<1x128xi32>
    %c7_i32 = arith.constant 7 : i32
    %25 = vector.broadcast %c7_i32 : i32 to vector<1x128xi32>
    %26 = arith.cmpi sgt, %24, %25 : vector<1x128xi32>
    %c6_i32 = arith.constant 6 : i32
    %27 = vector.broadcast %c6_i32 : i32 to vector<1x128xi32>
    %28 = arith.select %26, %27, %24 : vector<1x128xi1>, vector<1x128xi32>
    %c8_i32 = arith.constant 8 : i32
    %29 = vector.broadcast %c8_i32 : i32 to vector<1x128xi32>
    %30 = arith.muli %13, %29 : vector<1x128xi32>
    %31 = arith.addi %30, %28 : vector<1x128xi32>
    %c0_8 = arith.constant 0 : index
    %c0_9 = arith.constant 0 : index
    %32 = vector.load %arg2[%c0_8, %c0_9] : memref<1x128xi32, #tpu.memory_space<vmem>>, vector<1x128xi32>
    tpu.vector_store %arg2[%c0_8, %c0_9], %31 {strides = array<i32>} : memref<1x128xi32, #tpu.memory_space<vmem>>, vector<1x128xi32>,
    return
  }
  func.func @transform_0(%arg0: i32) -> (i32, i32) {
    %c0_i32 = arith.constant 0 : i32
    %c0_i32_0 = arith.constant 0 : i32
    return %arg0, %c0_i32 : i32, i32
  }
  func.func @transform_1(%arg0: i32) -> (i32, i32) {
    %c0_i32 = arith.constant 0 : i32
    %c0_i32_0 = arith.constant 0 : i32
    return %arg0, %c0_i32 : i32, i32
  }
}

</mosaic_0001>

<llo_original>
// kernel: tpu_custom_call.1
$region0: #{tpu_custom_call.1}
  #allocation0 [shape = 'u32[]', space=smem, size = 0x4, offset = 0x4, fixed_abs, tag = 'smem constant byte address 0x4 - core index']
  #allocation1 [shape = 'u32[72,128]{1,0:T(1,128)}', space=vmem, size = 0x9000, scoped, tag = 'internal scratch']
  %s0 = inlined_call_operand.hbm [shape: f32[1,128], index: 0, kind: input, shape index: {}]
  %s1 = inlined_call_operand.hbm [shape: s32[1,128], index: 1, kind: output, shape index: {}]
  %s2 = sld [smem:[#allocation0]]
  $region18: #{tpu_custom_call.1} parent=0
    _
  %s4 = ssub.s32 1, %s2
  %s5 = scalar_select 0, %s4, %s2
  $region1: #{tpu_custom_call.1} parent=0
    #allocation2 [shape = 'u8[512]{0}', space=vmem, size = 0x400, scoped, tag = 'input window, operand 0, single buffered']
    #allocation3 [shape = 's32[1]{0}', space=sflag, size = 0x4, scoped, tag = 'scoped memory for tpu_custom_call.1']
    #allocation4 [shape = 's32[1]{0}', space=sflag, size = 0x4, scoped, tag = 'scoped memory for tpu_custom_call.1']
    #allocation5 [shape = 'u8[512]{0}', space=vmem, size = 0x400, scoped, tag = 'output window, operand 0, single buffered']
    %6 = vsyncpa [#allocation3], 0
    %7 = vsyncpa [#allocation4], 0
    // Predicated region
    $region2: #{tpu_custom_call.1} parent=1 // pred_check
      _
    $region3: #{tpu_custom_call.1} parent=1 // pred_check_branch
      %9 = sbr.rel (0) target = $region5
    $region4: #{tpu_custom_call.1} parent=1 // pred_region
      %11 = vsyncadd [#allocation3], 0
      %s13 = sshll.u32 %s0, 4
      %s14 = int_to_ptr.hbm [resolvable:$true] %s13
      %s15 = sshll.u32 [#allocation2], 4
      %s16 = int_to_ptr.vmem [resolvable:$true] %s15
      %18 = dma.hbm_to_vmem [thread:$0]  %s14, 16, %s16, [#allocation3]
    $region5: #{tpu_custom_call.1} parent=1 // pred_fallthru
      _
    // Predicated region
    $region6: #{tpu_custom_call.1} parent=1 // pred_check
      _
    $region7: #{tpu_custom_call.1} parent=1 // pred_check_branch
      %20 = sbr.rel (0) target = $region9
    $region8: #{tpu_custom_call.1} parent=1 // pred_region
      %22 = dma.done [#allocation3], 16
    $region9: #{tpu_custom_call.1} parent=1 // pred_fallthru
      _
    %v23 = vld [vmem:[#allocation2] sm:$0x1]
    %v24 = vsub.f32 %v23, -2.0
    %v25 = vmul.f32 %v24, 1.75
    %v26 = vsub.f32 %v25, 0.5
    %v27 = vceil.f32 %v26
    %v28 = vmax.f32 %v27, 0.0
    %v29 = vmin.f32 %v28, 7.0
    %v30 = vsub.f32 %v25, %v29
    %v31 = vcvt.f32.s32.to.zero.pseudo %v29
    %vm32 = vcmp.gt.f32.partialorder %v30, 0.0
    %v33 = vadd.s32 %v31, 1
    %v34 = vsub.s32 %v31, 1
    %v35 = vsel %vm32, %v33, %v34
    %vm36 = vcmp.lt.s32.totalorder %v35, 0
    %v37 = vsel %vm36, 1, %v35
    %vm38 = vcmp.gt.s32.totalorder %v37, 7
    %v39 = vsel %vm38, 6, %v37
    %v40 = vmul.u32 %v31, 8
    %v41 = vadd.s32 %v40, %v39
    %42 = vst [vmem:[#allocation5] sm:$0x1] %v41
    // Predicated region
    $region10: #{tpu_custom_call.1} parent=1 // pred_check
      _
    $region11: #{tpu_custom_call.1} parent=1 // pred_check_branch
      %44 = sbr.rel (0) target = $region13
    $region12: #{tpu_custom_call.1} parent=1 // pred_region
      %46 = vsyncadd [#allocation4], 0
      %s48 = sshll.u32 [#allocation5], 4
      %s49 = int_to_ptr.vmem [resolvable:$true] %s48
      %s50 = sshll.u32 %s1, 4
      %s51 = int_to_ptr.hbm [resolvable:$true] %s50
      %53 = dma.vmem_to_hbm [thread:$0]  %s49, 16, %s51, [#allocation4]
    $region13: #{tpu_custom_call.1} parent=1 // pred_fallthru
      _
    // Predicated region
    $region14: #{tpu_custom_call.1} parent=1 // pred_check
      _
    $region15: #{tpu_custom_call.1} parent=1 // pred_check_branch
      %55 = sbr.rel (0) target = $region17
    $region16: #{tpu_custom_call.1} parent=1 // pred_region
      %57 = dma.done [#allocation4], 16
    $region17: #{tpu_custom_call.1} parent=1 // pred_fallthru
      _
    %58 = vsyncpa [#allocation3], 1
    %59 = vsyncpa [#allocation4], 1

</llo_original>
